<compile_context>
chip_gen: v7x
topology: tpu7x:2x2x1
jax: 0.10.0
libtpu: 0.0.40
codegen_flags: <defaults>
</compile_context>

<pallas_src>
import functools

import jax
import jax.numpy as jnp
from jax.experimental import pallas as pl
from jax.experimental.pallas import tpu as pltpu

HIDDEN = 50          # matches nn.Linear(..., 50) in the PyTorch module
HIDDEN_PAD = 128     # lane-aligned hidden width (padding to 256 would only add zero FLOPs)
TILE_B = 2048        # batch tile; fits default scoped VMEM on all generations
MIN_SPLIT_B = 256    # below this, use one full-extent block (splitting buys nothing)


def _disc_kernel(x_ref, w1_ref, b1_ref, w2_ref, b2_ref,
                 w4_ref, b4_ref, w3_ref, b3_ref, o_ref):
    f32, bf16 = jnp.float32, jnp.bfloat16
    # fc1 -> tanh  (bf16 MXU operands, f32 accumulate, f32 bias + tanh)
    h = jnp.tanh(jnp.dot(x_ref[...].astype(bf16), w1_ref[...],
                         preferred_element_type=f32) + b1_ref[...])
    # fc2 -> tanh
    h = jnp.tanh(jnp.dot(h.astype(bf16), w2_ref[...],
                         preferred_element_type=f32) + b2_ref[...])
    # fc4 -> tanh
    h = jnp.tanh(jnp.dot(h.astype(bf16), w4_ref[...],
                         preferred_element_type=f32) + b4_ref[...])
    # fc3 (hidden -> 1), emitted lane-dense as a (1, tb) row: transpose h (XLU slot,
    # idle relative to MXU/VPU/EUP here) and do a tiny (1,hp) @ (hp,tb) matmul in f32,
    # avoiding a lane-width-1 output block (masked stores + padded VMEM out buffer).
    o_ref[...] = (jnp.dot(w3_ref[...], h.T, preferred_element_type=f32)
                  + b3_ref[...])


def _pad_params(params):
    """Zero-pad hidden 50 -> HIDDEN_PAD; matmul weights cast to bf16 (padding is exact)."""
    d = params["w1"].shape[0]
    hp = HIDDEN_PAD

    def pad2d(a, shape, dtype):
        return jnp.zeros(shape, dtype).at[: a.shape[0], : a.shape[1]].set(a.astype(dtype))

    return (
        pad2d(params["w1"], (d, hp), jnp.bfloat16),
        pad2d(params["b1"], (1, hp), jnp.float32),
        pad2d(params["w2"], (hp, hp), jnp.bfloat16),
        pad2d(params["b2"], (1, hp), jnp.float32),
        pad2d(params["w4"], (hp, hp), jnp.bfloat16),
        pad2d(params["b4"], (1, hp), jnp.float32),
        pad2d(params["w3"].T, (1, hp), jnp.float32),   # fc3 weight as a (1, hp) f32 row
        params["b3"].reshape(1, 1).astype(jnp.float32),
    )


def _round_up(n, m):
    return ((n + m - 1) // m) * m


def _choose_tile(b, tile_b):
    if b <= MIN_SPLIT_B:
        return b, 1  # tiny batch: one full-extent block
    # >= 2 grid steps so both TensorCores get work on v7x (parallel axis sharding);
    # tile is a multiple of 128 so the (1, tb) output block stores unmasked.
    tb = min(tile_b, _round_up(pl.cdiv(b, 2), 128))
    return tb, pl.cdiv(b, tb)


@functools.partial(jax.jit, static_argnames=("tile_b",))
def discriminator_forward(x, params, *, tile_b=TILE_B):
    """x: (B, input_dim) float32.  params: dict of (in, out) weights and (1, out) biases."""
    b, d = x.shape
    hp = HIDDEN_PAD
    tb, ntiles = _choose_tile(b, tile_b)
    padded = _pad_params(params)

    def const(shape):
        # Same block index every grid step -> DMA'd once, stays VMEM-resident.
        # (pipeline_mode=pl.Buffered(1) would trim ~0.3 MiB of double-buffering;
        #  omitted as the VMEM budget is not tight at this tile size.)
        return pl.BlockSpec(shape, lambda i: (0, 0))

    out = pl.pallas_call(
        _disc_kernel,
        out_shape=jax.ShapeDtypeStruct((1, ntiles * tb), jnp.float32),
        grid=(ntiles,),
        in_specs=[
            pl.BlockSpec((tb, d), lambda i: (i, 0)),   # x: tiled over the batch
            const((d, hp)), const((1, hp)),            # fc1
            const((hp, hp)), const((1, hp)),           # fc2
            const((hp, hp)), const((1, hp)),           # fc4
            const((1, hp)), const((1, 1)),             # fc3 row weight + bias
        ],
        out_specs=pl.BlockSpec((1, tb), lambda i: (0, i)),   # lane-dense output row
        compiler_params=pltpu.CompilerParams(
            dimension_semantics=("parallel",),                # megacore sharding on v7x
            vmem_limit_bytes=32 * 1024 * 1024),               # headroom on v5e (default 16 MiB)
    )(x, *padded)
    # Back to the module's (B, 1) output; ragged-tile tail columns are dropped here.
    return out[0, :b].reshape(b, 1)


def init_params(key, input_dim, hidden=HIDDEN):
    """Deterministic init mimicking nn.Linear's uniform(-1/sqrt(fan_in), 1/sqrt(fan_in))."""
    ks = jax.random.split(key, 8)

    def linear(kw, kb, fan_in, fan_out):
        bound = 1.0 / jnp.sqrt(fan_in)
        w = jax.random.uniform(kw, (fan_in, fan_out), jnp.float32, -bound, bound)
        b = jax.random.uniform(kb, (1, fan_out), jnp.float32, -bound, bound)
        return w, b

    w1, b1 = linear(ks[0], ks[1], input_dim, hidden)
    w2, b2 = linear(ks[2], ks[3], hidden, hidden)
    w4, b4 = linear(ks[4], ks[5], hidden, hidden)
    w3, b3 = linear(ks[6], ks[7], hidden, 1)
    return {"w1": w1, "b1": b1, "w2": w2, "b2": b2,
            "w4": w4, "b4": b4, "w3": w3, "b3": b3}


def reference_forward(x, p):
    """Pure-JAX reference mirroring the kernel numerics (bf16 operands, f32 accumulate)."""
    bf16, f32 = jnp.bfloat16, jnp.float32

    def mm(a, w):
        return jnp.dot(a.astype(bf16), w.astype(bf16), preferred_element_type=f32)

    h = jnp.tanh(mm(x, p["w1"]) + p["b1"])
    h = jnp.tanh(mm(h, p["w2"]) + p["b2"])
    h = jnp.tanh(mm(h, p["w4"]) + p["b4"])
    return jnp.dot(h, p["w3"], preferred_element_type=f32) + p["b3"]


if __name__ == "__main__":
    key = jax.random.PRNGKey(0)
    k_param, k_x1, k_x2 = jax.random.split(key, 3)

    input_dim = 32  # IS_DISCRETE only gated unused branches; forward is a pure MLP
    params = init_params(k_param, input_dim)

    # Small batch: single full-extent block path.
    x_small = jax.random.normal(k_x1, (8, input_dim), dtype=jnp.float32)
    out_small = jax.block_until_ready(discriminator_forward(x_small, params))
    assert out_small.shape == (8, 1)
    assert jnp.allclose(out_small, reference_forward(x_small, params), atol=5e-3, rtol=5e-3)

    # Larger batch: exercises the >=2-step tiled, pipelined grid path with a ragged tile.
    x_big = jax.random.normal(k_x2, (640, input_dim), dtype=jnp.float32)
    out_big = jax.block_until_ready(discriminator_forward(x_big, params))
    assert out_big.shape == (640, 1)
    assert jnp.allclose(out_big, reference_forward(x_big, params), atol=5e-3, rtol=5e-3)

    print("KERNEL_OK")
</pallas_src>

<mosaic_0001>
module attributes {stable_mosaic.version = 11 : i64} {
  func.func @_disc_kernel(%arg0: i32, %arg1: memref<8x32xf32, #tpu.memory_space<vmem>>, %arg2: memref<32x128xbf16, #tpu.memory_space<vmem>>, %arg3: memref<1x128xf32, #tpu.memory_space<vmem>>, %arg4: memref<128x128xbf16, #tpu.memory_space<vmem>>, %arg5: memref<1x128xf32, #tpu.memory_space<vmem>>, %arg6: memref<128x128xbf16, #tpu.memory_space<vmem>>, %arg7: memref<1x128xf32, #tpu.memory_space<vmem>>, %arg8: memref<1x128xf32, #tpu.memory_space<vmem>>, %arg9: memref<1x1xf32, #tpu.memory_space<vmem>>, %arg10: memref<1x8xf32, #tpu.memory_space<vmem>>) attributes {dimension_semantics = [#tpu.dimension_semantics<parallel>], iteration_bounds = array<i64: 1>, scalar_prefetch = 0 : i64, scratch_operands = 0 : i64, tpu.core_type = #tpu.core_type<tc>, window_params = [{transform_indices = @transform_0, window_bounds = array<i64: 8, 32>}, {pipeline_mode = #tpu.pipeline_mode<synchronous>, transform_indices = @transform_1, window_bounds = array<i64: 32, 128>}, {pipeline_mode = #tpu.pipeline_mode<synchronous>, transform_indices = @transform_2, window_bounds = array<i64: 1, 128>}, {pipeline_mode = #tpu.pipeline_mode<synchronous>, transform_indices = @transform_3, window_bounds = array<i64: 128, 128>}, {pipeline_mode = #tpu.pipeline_mode<synchronous>, transform_indices = @transform_4, window_bounds = array<i64: 1, 128>}, {pipeline_mode = #tpu.pipeline_mode<synchronous>, transform_indices = @transform_5, window_bounds = array<i64: 128, 128>}, {pipeline_mode = #tpu.pipeline_mode<synchronous>, transform_indices = @transform_6, window_bounds = array<i64: 1, 128>}, {pipeline_mode = #tpu.pipeline_mode<synchronous>, transform_indices = @transform_7, window_bounds = array<i64: 1, 128>}, {pipeline_mode = #tpu.pipeline_mode<synchronous>, transform_indices = @transform_8, window_bounds = array<i64: 1, 1>}, {transform_indices = @transform_9, window_bounds = array<i64: 1, 8>}]} {
    %c0 = arith.constant 0 : index
    %c0_0 = arith.constant 0 : index
    %0 = vector.load %arg1[%c0, %c0_0] : memref<8x32xf32, #tpu.memory_space<vmem>>, vector<8x32xf32>
    %1 = arith.truncf %0 : vector<8x32xf32> to vector<8x32xbf16>
    %c0_1 = arith.constant 0 : index
    %c0_2 = arith.constant 0 : index
    %2 = vector.load %arg2[%c0_1, %c0_2] : memref<32x128xbf16, #tpu.memory_space<vmem>>, vector<32x128xbf16>
    %cst = arith.constant dense<0.000000e+00> : vector<8x128xf32>
    %3 = tpu.matmul %1, %2, %cst {dimension_numbers = #tpu.dot_dimension_numbers<[1], [0], [0], [1], [0, 0, 1, 1], [], []>} : vector<8x32xbf16>, vector<32x128xbf16>, vector<8x128xf32> -> vector<8x128xf32>
    %c0_3 = arith.constant 0 : index
    %c0_4 = arith.constant 0 : index
    %4 = vector.load %arg3[%c0_3, %c0_4] : memref<1x128xf32, #tpu.memory_space<vmem>>, vector<1x128xf32>
    %5 = vector.broadcast %4 : vector<1x128xf32> to vector<8x128xf32>
    %6 = arith.addf %3, %5 : vector<8x128xf32>
    %7 = math.tanh %6 : vector<8x128xf32>
    %8 = arith.truncf %7 : vector<8x128xf32> to vector<8x128xbf16>
    %c0_5 = arith.constant 0 : index
    %c0_6 = arith.constant 0 : index
    %9 = vector.load %arg4[%c0_5, %c0_6] : memref<128x128xbf16, #tpu.memory_space<vmem>>, vector<128x128xbf16>
    %cst_7 = arith.constant dense<0.000000e+00> : vector<8x128xf32>
    %10 = tpu.matmul %8, %9, %cst_7 {dimension_numbers = #tpu.dot_dimension_numbers<[1], [0], [0], [1], [0, 0, 1, 1], [], []>} : vector<8x128xbf16>, vector<128x128xbf16>, vector<8x128xf32> -> vector<8x128xf32>
    %c0_8 = arith.constant 0 : index
    %c0_9 = arith.constant 0 : index
    %11 = vector.load %arg5[%c0_8, %c0_9] : memref<1x128xf32, #tpu.memory_space<vmem>>, vector<1x128xf32>
    %12 = vector.broadcast %11 : vector<1x128xf32> to vector<8x128xf32>
    %13 = arith.addf %10, %12 : vector<8x128xf32>
    %14 = math.tanh %13 : vector<8x128xf32>
    %15 = arith.truncf %14 : vector<8x128xf32> to vector<8x128xbf16>
    %c0_10 = arith.constant 0 : index
    %c0_11 = arith.constant 0 : index
    %16 = vector.load %arg6[%c0_10, %c0_11] : memref<128x128xbf16, #tpu.memory_space<vmem>>, vector<128x128xbf16>
    %cst_12 = arith.constant dense<0.000000e+00> : vector<8x128xf32>
    %17 = tpu.matmul %15, %16, %cst_12 {dimension_numbers = #tpu.dot_dimension_numbers<[1], [0], [0], [1], [0, 0, 1, 1], [], []>} : vector<8x128xbf16>, vector<128x128xbf16>, vector<8x128xf32> -> vector<8x128xf32>
    %c0_13 = arith.constant 0 : index
    %c0_14 = arith.constant 0 : index
    %18 = vector.load %arg7[%c0_13, %c0_14] : memref<1x128xf32, #tpu.memory_space<vmem>>, vector<1x128xf32>
    %19 = vector.broadcast %18 : vector<1x128xf32> to vector<8x128xf32>
    %20 = arith.addf %17, %19 : vector<8x128xf32>
    %21 = math.tanh %20 : vector<8x128xf32>
    %c0_15 = arith.constant 0 : index
    %c0_16 = arith.constant 0 : index
    %22 = vector.load %arg8[%c0_15, %c0_16] : memref<1x128xf32, #tpu.memory_space<vmem>>, vector<1x128xf32>
    %23 = tpu.transpose %21, [1, 0] : vector<8x128xf32> -> vector<128x8xf32>
    %cst_17 = arith.constant dense<0.000000e+00> : vector<1x8xf32>
    %24 = tpu.matmul %22, %23, %cst_17 {dimension_numbers = #tpu.dot_dimension_numbers<[1], [0], [0], [1], [0, 0, 1, 1], [], []>} : vector<1x128xf32>, vector<128x8xf32>, vector<1x8xf32> -> vector<1x8xf32>
    %c0_18 = arith.constant 0 : index
    %c0_19 = arith.constant 0 : index
    %25 = vector.load %arg9[%c0_18, %c0_19] : memref<1x1xf32, #tpu.memory_space<vmem>>, vector<1x1xf32>
    %26 = vector.broadcast %25 : vector<1x1xf32> to vector<1x8xf32>
    %27 = arith.addf %24, %26 : vector<1x8xf32>
    %c0_20 = arith.constant 0 : index
    %c0_21 = arith.constant 0 : index
    %28 = vector.load %arg10[%c0_20, %c0_21] : memref<1x8xf32, #tpu.memory_space<vmem>>, vector<1x8xf32>
    tpu.vector_store %arg10[%c0_20, %c0_21], %27 {strides = array<i32>} : memref<1x8xf32, #tpu.memory_space<vmem>>, vector<1x8xf32>,
    return
  }
  func.func @transform_0(%arg0: i32) -> (i32, i32) {
    %c0_i32 = arith.constant 0 : i32
    %c0_i32_0 = arith.constant 0 : i32
    return %arg0, %c0_i32 : i32, i32
  }
  func.func @transform_1(%arg0: i32) -> (i32, i32) {
    %c0_i32 = arith.constant 0 : i32
    %c0_i32_0 = arith.constant 0 : i32
    %c0_i32_1 = arith.constant 0 : i32
    return %c0_i32, %c0_i32_0 : i32, i32
  }
  func.func @transform_2(%arg0: i32) -> (i32, i32) {
    %c0_i32 = arith.constant 0 : i32
    %c0_i32_0 = arith.constant 0 : i32
    %c0_i32_1 = arith.constant 0 : i32
    return %c0_i32, %c0_i32_0 : i32, i32
  }
  func.func @transform_3(%arg0: i32) -> (i32, i32) {
    %c0_i32 = arith.constant 0 : i32
    %c0_i32_0 = arith.constant 0 : i32
    %c0_i32_1 = arith.constant 0 : i32
    return %c0_i32, %c0_i32_0 : i32, i32
  }
  func.func @transform_4(%arg0: i32) -> (i32, i32) {
    %c0_i32 = arith.constant 0 : i32
    %c0_i32_0 = arith.constant 0 : i32
    %c0_i32_1 = arith.constant 0 : i32
    return %c0_i32, %c0_i32_0 : i32, i32
  }
  func.func @transform_5(%arg0: i32) -> (i32, i32) {
    %c0_i32 = arith.constant 0 : i32
    %c0_i32_0 = arith.constant 0 : i32
    %c0_i32_1 = arith.constant 0 : i32
    return %c0_i32, %c0_i32_0 : i32, i32
  }
  func.func @transform_6(%arg0: i32) -> (i32, i32) {
    %c0_i32 = arith.constant 0 : i32
    %c0_i32_0 = arith.constant 0 : i32
    %c0_i32_1 = arith.constant 0 : i32
    return %c0_i32, %c0_i32_0 : i32, i32
  }
  func.func @transform_7(%arg0: i32) -> (i32, i32) {
    %c0_i32 = arith.constant 0 : i32
    %c0_i32_0 = arith.constant 0 : i32
    %c0_i32_1 = arith.constant 0 : i32
    return %c0_i32, %c0_i32_0 : i32, i32
  }
  func.func @transform_8(%arg0: i32) -> (i32, i32) {
    %c0_i32 = arith.constant 0 : i32
    %c0_i32_0 = arith.constant 0 : i32
    %c0_i32_1 = arith.constant 0 : i32
    return %c0_i32, %c0_i32_0 : i32, i32
  }
  func.func @transform_9(%arg0: i32) -> (i32, i32) {
    %c0_i32 = arith.constant 0 : i32
    %c0_i32_0 = arith.constant 0 : i32
    return %c0_i32, %arg0 : i32, i32
  }
}

</mosaic_0001>

<llo_original>
// kernel: discriminator_forward.1
$region0: #{discriminator_forward.1}
  #allocation0 [shape = 'u32[]', space=smem, size = 0x4, offset = 0x4, fixed_abs, tag = 'smem constant byte address 0x4 - core index']
  #allocation1 [shape = 'u32[144,128]{1,0:T(1,128)}', space=vmem, size = 0x12000, scoped, tag = 'internal scratch']
  #allocation2 [shape = 'f32[1,1]{1,0:T(1,128)S(1)}', space=vmem, size = 0x200, scoped, tag = 'scoped memory for discriminator_forward.1']
  %s0 = inlined_call_operand.vmem [shape: f32[8,32], index: 0, kind: input, shape index: {}]
  %s1 = inlined_call_operand.vmem [shape: bf16[32,128], index: 1, kind: input, shape index: {}]
  %s2 = inlined_call_operand.vmem [shape: f32[1,128], index: 2, kind: input, shape index: {}]
  %s3 = inlined_call_operand.vmem [shape: bf16[128,128], index: 3, kind: input, shape index: {}]
  %s4 = inlined_call_operand.vmem [shape: f32[1,128], index: 4, kind: input, shape index: {}]
  %s5 = inlined_call_operand.vmem [shape: bf16[128,128], index: 5, kind: input, shape index: {}]
  %s6 = inlined_call_operand.vmem [shape: f32[1,128], index: 6, kind: input, shape index: {}]
  %s7 = inlined_call_operand.vmem [shape: f32[1,128], index: 7, kind: input, shape index: {}]
  %s8 = inlined_call_operand.<no memory space> [shape: f32[1,1], index: 8, kind: input, shape index: {}]
  %s9 = inlined_call_operand.hbm [shape: f32[1,8], index: 9, kind: output, shape index: {}]
  %s10 = sld [smem:[#allocation0]]
  $region46: #{discriminator_forward.1} parent=0
    _
  %s12 = ssub.s32 1, %s10
  %s13 = scalar_select 0, %s12, %s10
  %v14 = vstv %s8
  %15 = vst [vmem:[#allocation2] sm:$0x1] %v14
  $region1: #{discriminator_forward.1} parent=0
    #allocation3 [shape = 'u8[512]{0}', space=vmem, size = 0x400, scoped, tag = 'output window, operand 0, single buffered']
    #allocation4 [shape = 's32[1]{0}', space=sflag, size = 0x4, scoped, tag = 'scoped memory for discriminator_forward.1']
    %16 = vsyncpa [#allocation4], 0
    // Predicated region
    $region2: #{discriminator_forward.1} parent=1 // pred_check
      _
    $region3: #{discriminator_forward.1} parent=1 // pred_check_branch
      %18 = sbr.rel (0) target = $region5
    $region4: #{discriminator_forward.1} parent=1 // pred_region
      _
    $region5: #{discriminator_forward.1} parent=1 // pred_fallthru
      _
    // Predicated region
    $region6: #{discriminator_forward.1} parent=1 // pred_check
      _
    $region7: #{discriminator_forward.1} parent=1 // pred_check_branch
      %20 = sbr.rel (0) target = $region9
    $region8: #{discriminator_forward.1} parent=1 // pred_region
      _
    $region9: #{discriminator_forward.1} parent=1 // pred_fallthru
      _
    // Predicated region
    $region10: #{discriminator_forward.1} parent=1 // pred_check
      _
    $region11: #{discriminator_forward.1} parent=1 // pred_check_branch
      %22 = sbr.rel (0) target = $region13
    $region12: #{discriminator_forward.1} parent=1 // pred_region
      _
    $region13: #{discriminator_forward.1} parent=1 // pred_fallthru
      _
    // Predicated region
    $region14: #{discriminator_forward.1} parent=1 // pred_check
      _
    $region15: #{discriminator_forward.1} parent=1 // pred_check_branch
      %24 = sbr.rel (0) target = $region17
    $region16: #{discriminator_forward.1} parent=1 // pred_region
      _
    $region17: #{discriminator_forward.1} parent=1 // pred_fallthru
      _
    // Predicated region
    $region18: #{discriminator_forward.1} parent=1 // pred_check
      _
    $region19: #{discriminator_forward.1} parent=1 // pred_check_branch
      %26 = sbr.rel (0) target = $region21
    $region20: #{discriminator_forward.1} parent=1 // pred_region
      _
    $region21: #{discriminator_forward.1} parent=1 // pred_fallthru
      _
    // Predicated region
    $region22: #{discriminator_forward.1} parent=1 // pred_check
      _
    $region23: #{discriminator_forward.1} parent=1 // pred_check_branch
      %28 = sbr.rel (0) target = $region25
    $region24: #{discriminator_forward.1} parent=1 // pred_region
      _
    $region25: #{discriminator_forward.1} parent=1 // pred_fallthru
      _
    // Predicated region
    $region26: #{discriminator_forward.1} parent=1 // pred_check
      _
    $region27: #{discriminator_forward.1} parent=1 // pred_check_branch
      %30 = sbr.rel (0) target = $region29
    $region28: #{discriminator_forward.1} parent=1 // pred_region
      _
    $region29: #{discriminator_forward.1} parent=1 // pred_fallthru
      _
    // Predicated region
    $region30: #{discriminator_forward.1} parent=1 // pred_check
      _
    $region31: #{discriminator_forward.1} parent=1 // pred_check_branch
      %32 = sbr.rel (0) target = $region33
    $region32: #{discriminator_forward.1} parent=1 // pred_region
      _
    $region33: #{discriminator_forward.1} parent=1 // pred_fallthru
      _
    // Predicated region
    $region34: #{discriminator_forward.1} parent=1 // pred_check
      _
    $region35: #{discriminator_forward.1} parent=1 // pred_check_branch
      %34 = sbr.rel (0) target = $region37
    $region36: #{discriminator_forward.1} parent=1 // pred_region
      _
    $region37: #{discriminator_forward.1} parent=1 // pred_fallthru
      _
    %v36 = vld [vmem:[%s0] sm:$0xff]
    %v37 = vpack.c.bf16 %v36, %v36
    %v38 = vld [vmem:[%s1] sm:$0xf]
    %v39 = vld [vmem:[%s1 + $0x4] sm:$0xf]
    %v40 = vld [vmem:[%s1 + $0x8] sm:$0xf]
    %v41 = vld [vmem:[%s1 + $0xc] sm:$0xf]
    %v42 = vld [vmem:[%s2] sm:$0x1]
    %v44 = vlaneseq
    %v45 = vshrl.u32 %v44, 7
    %v46 = vsub.s32 0, %v45
    %v47 = vrot.slane %v42, %v46
    %v53 = vunpack.c.l.b16 %v38
    %v54 = vunpack.c.l.b16 %v39
    %v55 = vunpack.c.l.b16 %v40
    %v56 = vunpack.c.l.b16 %v41
    %v57 = vpack.c.b16 %v54, %v53
    %v58 = vpack.c.b16 %v56, %v55
    %vm61 = vcmask 261120
    %v63 = vsel %vm61, %v37, 0
    %65 = vmatprep.subr.bf16.mxu0 0
    %66 = vmatpush1.bf16.msra.mxu0 %v57
    %67 = vmatprep.subr.bf16.mxu0 0
    %68 = vmatpush1.bf16.msra.mxu0 %v58
    %69 = vmatprep.subr.bf16.mxu0 0
    %70 = vmatpush1.bf16.msra.mxu0 0
    %71 = vmatprep.subr.bf16.mxu0 0
    %72 = vmatpush1.bf16.msra.mxu0 0
    %73 = vmatprep.subr.bf16.mxu0 0
    %74 = vmatpush1.bf16.msra.mxu0 0
    %75 = vmatprep.subr.bf16.mxu0 0
    %76 = vmatpush1.bf16.msra.mxu0 0
    %77 = vmatprep.subr.bf16.mxu0 0
    %78 = vmatpush1.bf16.msra.mxu0 0
    %79 = vmatprep.subr.bf16.mxu0 0
    %80 = vmatpush1.bf16.msra.mxu0 0
    %81 = vmatprep.subr.bf16.mxu0 0
    %82 = vmatpush1.bf16.msra.mxu0 0
    %83 = vmatprep.subr.bf16.mxu0 0
    %84 = vmatpush1.bf16.msra.mxu0 0
    %85 = vmatprep.subr.bf16.mxu0 0
    %86 = vmatpush1.bf16.msra.mxu0 0
    %87 = vmatprep.subr.bf16.mxu0 0
    %88 = vmatpush1.bf16.msra.mxu0 0
    %89 = vmatprep.subr.bf16.mxu0 0
    %90 = vmatpush1.bf16.msra.mxu0 0
    %91 = vmatprep.subr.bf16.mxu0 0
    %92 = vmatpush1.bf16.msra.mxu0 0
    %93 = vmatprep.subr.bf16.mxu0 0
    %94 = vmatpush1.bf16.msra.mxu0 0
    %95 = vmatprep.subr.bf16.mxu0 0
    %96 = vmatpush1.bf16.msra.mxu0 0
    %97 = vmatprep.mubr.bf16.mxu0 0
    %98 = vmatmul.mubr.bf16.gmra.mrb[0].mxu0 %v63
    %v99 = vpop.f32.mrb[0].mxu0
    %v100 = vadd.f32 %v47, %v99
    %v101 = vpop.f32.mrb[0].mxu0
    %v102 = vpop.f32.mrb[0].mxu0
    %v103 = vpop.f32.mrb[0].mxu0
    %104 = vdwg.mxu0
    %v105 = vtanh.pop %v100
    %v106 = vpack.c.bf16 %v105, %v105
    %v107 = vld [vmem:[%s3] sm:$0xf]
    %v108 = vld [vmem:[%s3 + $0x4] sm:$0xf]
    %v109 = vld [vmem:[%s3 + $0x8] sm:$0xf]
    %v110 = vld [vmem:[%s3 + $0xc] sm:$0xf]
    %v111 = vld [vmem:[%s3 + $0x10] sm:$0xf]
    %v112 = vld [vmem:[%s3 + $0x14] sm:$0xf]
    %v113 = vld [vmem:[%s3 + $0x18] sm:$0xf]
    %v114 = vld [vmem:[%s3 + $0x1c] sm:$0xf]
    %v115 = vld [vmem:[%s3 + $0x20] sm:$0xf]
    %v116 = vld [vmem:[%s3 + $0x24] sm:$0xf]
    %v117 = vld [vmem:[%s3 + $0x28] sm:$0xf]
    %v118 = vld [vmem:[%s3 + $0x2c] sm:$0xf]
    %v119 = vld [vmem:[%s3 + $0x30] sm:$0xf]
    %v120 = vld [vmem:[%s3 + $0x34] sm:$0xf]
    %v121 = vld [vmem:[%s3 + $0x38] sm:$0xf]
    %v122 = vld [vmem:[%s3 + $0x3c] sm:$0xf]
    %v123 = vld [vmem:[%s4] sm:$0x1]
    %v125 = vlaneseq
    %v126 = vshrl.u32 %v125, 7
    %v127 = vsub.s32 0, %v126
    %v128 = vrot.slane %v123, %v127
    %v146 = vunpack.c.l.b16 %v107
    %v147 = vunpack.c.l.b16 %v108
    %v148 = vunpack.c.l.b16 %v109
    %v149 = vunpack.c.l.b16 %v110
    %v150 = vunpack.c.l.b16 %v111
    %v151 = vunpack.c.l.b16 %v112
    %v152 = vunpack.c.l.b16 %v113
    %v153 = vunpack.c.l.b16 %v114
    %v154 = vunpack.c.l.b16 %v115
    %v155 = vunpack.c.l.b16 %v116
    %v156 = vunpack.c.l.b16 %v117
    %v157 = vunpack.c.l.b16 %v118
    %v158 = vunpack.c.l.b16 %v119
    %v159 = vunpack.c.l.b16 %v120
    %v160 = vunpack.c.l.b16 %v121
    %v161 = vunpack.c.l.b16 %v122
    %v162 = vpack.c.b16 %v147, %v146
    %v163 = vpack.c.b16 %v149, %v148
    %v164 = vpack.c.b16 %v151, %v150
    %v165 = vpack.c.b16 %v153, %v152
    %v166 = vpack.c.b16 %v155, %v154
    %v167 = vpack.c.b16 %v157, %v156
    %v168 = vpack.c.b16 %v159, %v158
    %v169 = vpack.c.b16 %v161, %v160
    %178 = vmatprep.subr.bf16.mxu0 0
    %179 = vmatpush1.bf16.msra.mxu0 %v162
    %180 = vmatprep.subr.bf16.mxu0 0
    %181 = vmatpush1.bf16.msra.mxu0 %v163
    %182 = vmatprep.subr.bf16.mxu0 0
    %183 = vmatpush1.bf16.msra.mxu0 %v164
    %184 = vmatprep.subr.bf16.mxu0 0
    %185 = vmatpush1.bf16.msra.mxu0 %v165
    %186 = vmatprep.subr.bf16.mxu0 0
    %187 = vmatpush1.bf16.msra.mxu0 %v166
    %188 = vmatprep.subr.bf16.mxu0 0
    %189 = vmatpush1.bf16.msra.mxu0 %v167
    %190 = vmatprep.subr.bf16.mxu0 0
    %191 = vmatpush1.bf16.msra.mxu0 %v168
    %192 = vmatprep.subr.bf16.mxu0 0
    %193 = vmatpush1.bf16.msra.mxu0 %v169
    %194 = vmatprep.subr.bf16.mxu0 0
    %195 = vmatpush1.bf16.msra.mxu0 0
    %196 = vmatprep.subr.bf16.mxu0 0
    %197 = vmatpush1.bf16.msra.mxu0 0
    %198 = vmatprep.subr.bf16.mxu0 0
    %199 = vmatpush1.bf16.msra.mxu0 0
    %200 = vmatprep.subr.bf16.mxu0 0
    %201 = vmatpush1.bf16.msra.mxu0 0
    %202 = vmatprep.subr.bf16.mxu0 0
    %203 = vmatpush1.bf16.msra.mxu0 0
    %204 = vmatprep.subr.bf16.mxu0 0
    %205 = vmatpush1.bf16.msra.mxu0 0
    %206 = vmatprep.subr.bf16.mxu0 0
    %207 = vmatpush1.bf16.msra.mxu0 0
    %208 = vmatprep.subr.bf16.mxu0 0
    %209 = vmatpush1.bf16.msra.mxu0 0
    %210 = vmatprep.mubr.bf16.mxu0 0
    %211 = vmatmul.mubr.bf16.gmra.mrb[0].mxu0 %v106
    %v212 = vpop.f32.mrb[0].mxu0
    %v213 = vadd.f32 %v128, %v212
    %v214 = vpop.f32.mrb[0].mxu0
    %v215 = vpop.f32.mrb[0].mxu0
    %v216 = vpop.f32.mrb[0].mxu0
    %217 = vdwg.mxu0
    %v218 = vtanh.pop %v213
    %v219 = vpack.c.bf16 %v218, %v218
    %v220 = vld [vmem:[%s5] sm:$0xf]
    %v221 = vld [vmem:[%s5 + $0x4] sm:$0xf]
    %v222 = vld [vmem:[%s5 + $0x8] sm:$0xf]
    %v223 = vld [vmem:[%s5 + $0xc] sm:$0xf]
    %v224 = vld [vmem:[%s5 + $0x10] sm:$0xf]
    %v225 = vld [vmem:[%s5 + $0x14] sm:$0xf]
    %v226 = vld [vmem:[%s5 + $0x18] sm:$0xf]
    %v227 = vld [vmem:[%s5 + $0x1c] sm:$0xf]
    %v228 = vld [vmem:[%s5 + $0x20] sm:$0xf]
    %v229 = vld [vmem:[%s5 + $0x24] sm:$0xf]
    %v230 = vld [vmem:[%s5 + $0x28] sm:$0xf]
    %v231 = vld [vmem:[%s5 + $0x2c] sm:$0xf]
    %v232 = vld [vmem:[%s5 + $0x30] sm:$0xf]
    %v233 = vld [vmem:[%s5 + $0x34] sm:$0xf]
    %v234 = vld [vmem:[%s5 + $0x38] sm:$0xf]
    %v235 = vld [vmem:[%s5 + $0x3c] sm:$0xf]
    %v236 = vld [vmem:[%s6] sm:$0x1]
    %v238 = vlaneseq
    %v239 = vshrl.u32 %v238, 7
    %v240 = vsub.s32 0, %v239
    %v241 = vrot.slane %v236, %v240
    %v259 = vunpack.c.l.b16 %v220
    %v260 = vunpack.c.l.b16 %v221
    %v261 = vunpack.c.l.b16 %v222
    %v262 = vunpack.c.l.b16 %v223
    %v263 = vunpack.c.l.b16 %v224
    %v264 = vunpack.c.l.b16 %v225
    %v265 = vunpack.c.l.b16 %v226
    %v266 = vunpack.c.l.b16 %v227
    %v267 = vunpack.c.l.b16 %v228
    %v268 = vunpack.c.l.b16 %v229
    %v269 = vunpack.c.l.b16 %v230
    %v270 = vunpack.c.l.b16 %v231
    %v271 = vunpack.c.l.b16 %v232
    %v272 = vunpack.c.l.b16 %v233
    %v273 = vunpack.c.l.b16 %v234
    %v274 = vunpack.c.l.b16 %v235
    %v275 = vpack.c.b16 %v260, %v259
    %v276 = vpack.c.b16 %v262, %v261
    %v277 = vpack.c.b16 %v264, %v263
    %v278 = vpack.c.b16 %v266, %v265
    %v279 = vpack.c.b16 %v268, %v267
    %v280 = vpack.c.b16 %v270, %v269
    %v281 = vpack.c.b16 %v272, %v271
    %v282 = vpack.c.b16 %v274, %v273
    %291 = vmatprep.subr.bf16.mxu0 0
    %292 = vmatpush1.bf16.msra.mxu0 %v275
    %293 = vmatprep.subr.bf16.mxu0 0
    %294 = vmatpush1.bf16.msra.mxu0 %v276
    %295 = vmatprep.subr.bf16.mxu0 0
    %296 = vmatpush1.bf16.msra.mxu0 %v277
    %297 = vmatprep.subr.bf16.mxu0 0
    %298 = vmatpush1.bf16.msra.mxu0 %v278
    %299 = vmatprep.subr.bf16.mxu0 0
    %300 = vmatpush1.bf16.msra.mxu0 %v279
    %301 = vmatprep.subr.bf16.mxu0 0
    %302 = vmatpush1.bf16.msra.mxu0 %v280
    %303 = vmatprep.subr.bf16.mxu0 0
    %304 = vmatpush1.bf16.msra.mxu0 %v281
    %305 = vmatprep.subr.bf16.mxu0 0
    %306 = vmatpush1.bf16.msra.mxu0 %v282
    %307 = vmatprep.subr.bf16.mxu0 0
    %308 = vmatpush1.bf16.msra.mxu0 0
    %309 = vmatprep.subr.bf16.mxu0 0
    %310 = vmatpush1.bf16.msra.mxu0 0
    %311 = vmatprep.subr.bf16.mxu0 0
    %312 = vmatpush1.bf16.msra.mxu0 0
    %313 = vmatprep.subr.bf16.mxu0 0
    %314 = vmatpush1.bf16.msra.mxu0 0
    %315 = vmatprep.subr.bf16.mxu0 0
    %316 = vmatpush1.bf16.msra.mxu0 0
    %317 = vmatprep.subr.bf16.mxu0 0
    %318 = vmatpush1.bf16.msra.mxu0 0
    %319 = vmatprep.subr.bf16.mxu0 0
    %320 = vmatpush1.bf16.msra.mxu0 0
    %321 = vmatprep.subr.bf16.mxu0 0
    %322 = vmatpush1.bf16.msra.mxu0 0
    %323 = vmatprep.mubr.bf16.mxu0 0
    %324 = vmatmul.mubr.bf16.gmra.mrb[0].mxu0 %v219
    %v325 = vpop.f32.mrb[0].mxu0
    %v326 = vadd.f32 %v241, %v325
    %v327 = vpop.f32.mrb[0].mxu0
    %v328 = vpop.f32.mrb[0].mxu0
    %v329 = vpop.f32.mrb[0].mxu0
    %330 = vdwg.mxu0
    %v331 = vtanh.pop %v326
    %v332 = vld [vmem:[%s7] sm:$0x1]
    %v333 = vld [vmem:[#allocation2] sm:$0x1]
    %335 = vset.pattern.permute.xlu0 0
    %336 = vperm.xlu0 %335, %v333
    %v337 = vpop.permute.xlu0 %336
    %v339 = vlaneseq
    %v340 = vshrl.u32 %v339, 7
    %v341 = vsub.s32 0, %v340
    %v342 = vrot.slane %v337, %v341
    %343 = vmatprep.subr.mxu0 0.0
    %344 = vmatpush1.xpose.msra.mxu0 %v331
    %345 = vmatprep.subr.mxu0 0.0
    %346 = vmatpush1.xpose.msra.mxu0 0.0
    %347 = vmatprep.subr.mxu0 0.0
    %348 = vmatpush1.xpose.msra.mxu0 0.0
    %349 = vmatprep.subr.mxu0 0.0
    %350 = vmatpush1.xpose.msra.mxu0 0.0
    %351 = vmatprep.subr.mxu0 0.0
    %352 = vmatpush1.xpose.msra.mxu0 0.0
    %353 = vmatprep.subr.mxu0 0.0
    %354 = vmatpush1.xpose.msra.mxu0 0.0
    %355 = vmatprep.subr.mxu0 0.0
    %356 = vmatpush1.xpose.msra.mxu0 0.0
    %357 = vmatprep.subr.mxu0 0.0
    %358 = vmatpush1.xpose.msra.mxu0 0.0
    %359 = vmatprep.subr.mxu0 0.0
    %360 = vmatpush1.xpose.msra.mxu0 0.0
    %361 = vmatprep.subr.mxu0 0.0
    %362 = vmatpush1.xpose.msra.mxu0 0.0
    %363 = vmatprep.subr.mxu0 0.0
    %364 = vmatpush1.xpose.msra.mxu0 0.0
    %365 = vmatprep.subr.mxu0 0.0
    %366 = vmatpush1.xpose.msra.mxu0 0.0
    %367 = vmatprep.subr.mxu0 0.0
    %368 = vmatpush1.xpose.msra.mxu0 0.0
    %369 = vmatprep.subr.mxu0 0.0
    %370 = vmatpush1.xpose.msra.mxu0 0.0
    %371 = vmatprep.subr.mxu0 0.0
    %372 = vmatpush1.xpose.msra.mxu0 0.0
    %373 = vmatprep.subr.mxu0 0.0
    %374 = vmatpush1.xpose.msra.mxu0 0.0
    %375 = vmatprep.subr.mxu0 0.0
    %376 = vmatpush1.xpose.msra.mxu0 0.0
    %377 = vmatprep.subr.mxu0 0.0
    %378 = vmatpush1.xpose.msra.mxu0 0.0
    %379 = vmatprep.subr.mxu0 0.0
    %380 = vmatpush1.xpose.msra.mxu0 0.0
    %381 = vmatprep.subr.mxu0 0.0
    %382 = vmatpush1.xpose.msra.mxu0 0.0
    %383 = vmatprep.subr.mxu0 0.0
    %384 = vmatpush1.xpose.msra.mxu0 0.0
    %385 = vmatprep.subr.mxu0 0.0
    %386 = vmatpush1.xpose.msra.mxu0 0.0
    %387 = vmatprep.subr.mxu0 0.0
    %388 = vmatpush1.xpose.msra.mxu0 0.0
    %389 = vmatprep.subr.mxu0 0.0
    %390 = vmatpush1.xpose.msra.mxu0 0.0
    %391 = vmatprep.subr.mxu0 0.0
    %392 = vmatpush1.xpose.msra.mxu0 0.0
    %393 = vmatprep.subr.mxu0 0.0
    %394 = vmatpush1.xpose.msra.mxu0 0.0
    %395 = vmatprep.subr.mxu0 0.0
    %396 = vmatpush1.xpose.msra.mxu0 0.0
    %397 = vmatprep.subr.mxu0 0.0
    %398 = vmatpush1.xpose.msra.mxu0 0.0
    %399 = vmatprep.subr.mxu0 0.0
    %400 = vmatpush1.xpose.msra.mxu0 0.0
    %401 = vmatprep.subr.mxu0 0.0
    %402 = vmatpush1.xpose.msra.mxu0 0.0
    %403 = vmatprep.subr.mxu0 0.0
    %404 = vmatpush1.xpose.msra.mxu0 0.0
    %405 = vmatprep.subr.mxu0 0.0
    %406 = vmatpush1.xpose.msra.mxu0 0.0
    %407 = vmatprep.mubr.f32.mxu0 0.0
    %408 = vmatmul.mubr.f32.gmra.mrb[0].mxu0 %v332
    %v409 = vpop.f32.mrb[0].mxu0
    %v410 = vadd.f32 %v342, %v409
    %v411 = vpop.f32.mrb[0].mxu0
    %412 = vdwg.mxu0
    %vm413 = vcmask 57344
    %414 = vst.msk [vmem:[#allocation3] sm:$0x1] %vm413, %v410
    // Predicated region
    $region38: #{discriminator_forward.1} parent=1 // pred_check
      _
    $region39: #{discriminator_forward.1} parent=1 // pred_check_branch
      %416 = sbr.rel (0) target = $region41
    $region40: #{discriminator_forward.1} parent=1 // pred_region
      %s418 = ssub.s32 16, 16
      %419 = vsyncadd [#allocation4], %s418
      %s421 = sshll.u32 [#allocation3], 4
      %s422 = int_to_ptr.vmem [resolvable:$true] %s421
      %424 = dma.vmem_to_hbm [thread:$0]  %s422, 16, %s9, [#allocation4]
    $region41: #{discriminator_forward.1} parent=1 // pred_fallthru
      _
    // Predicated region
    $region42: #{discriminator_forward.1} parent=1 // pred_check
      _
    $region43: #{discriminator_forward.1} parent=1 // pred_check_branch
      %426 = sbr.rel (0) target = $region45
    $region44: #{discriminator_forward.1} parent=1 // pred_region
      %427 = dma.done [#allocation4], 16
    $region45: #{discriminator_forward.1} parent=1 // pred_fallthru
      _
    %428 = vsyncpa [#allocation4], 1

</llo_original>
